<compile_context>
chip_gen: v7x
topology: tpu7x:2x2x1
jax: 0.10.0
libtpu: 0.0.40
codegen_flags: <defaults>
</compile_context>

<pallas_src>
import jax
import jax.numpy as jnp
from jax.experimental import pallas as pl
from jax.experimental.pallas import tpu as pltpu


def _round_up(x, m):
    return (x + m - 1) // m * m


def _choose_tile_b(B, tile_b):
    """Round to multiples of 16 (bf16 packing); keep >=2 tiles for moderate B (v7x)."""
    tile_b = max(16, (tile_b // 16) * 16)
    tile_b = min(tile_b, _round_up(B, 16))          # never bigger than the batch itself
    if B > 16:
        half = _round_up((B + 1) // 2, 16)          # >=2 tiles so megacore can split batch
        tile_b = min(tile_b, max(16, half))
    return tile_b


def _fusion_kernel(f_ref, p_ref, wf_ref, wp_ref, bf_ref, bp_ref,
                   w1f_ref, w1p_ref, b1_ref, w2d_ref, b2d_ref, out_ref):
    # f_ref:  [TB, flevel] f32 batch tile     wf_ref:  [flevel, align] bf16 (resident)
    # p_ref:  [TB, plevel] f32 batch tile     wp_ref:  [plevel, align] bf16 (resident)
    # bf/bp:  [1, align] f32                  w1f/w1p: [align, hidden] bf16 (resident)
    # b1:     [1, hidden] f32                 w2d:     [1, hidden] f32 (w2[:,0]-w2[:,1])
    # b2d:    [1, 1] f32                      out_ref: [TB, align] (bf16 by default)
    f_in = f_ref[...].astype(jnp.bfloat16)
    p_in = p_ref[...].astype(jnp.bfloat16)

    # Input projections: MXU matmul with f32 accumulation, bias added in f32,
    # then a single cast to bf16 that is reused for both the W1 matmuls and the blend.
    f_proj = (jnp.dot(f_in, wf_ref[...], preferred_element_type=jnp.float32)
              + bf_ref[...]).astype(jnp.bfloat16)                    # [TB, align]
    p_proj = (jnp.dot(p_in, wp_ref[...], preferred_element_type=jnp.float32)
              + bp_ref[...]).astype(jnp.bfloat16)                    # [TB, align]

    # Attention hidden layer: cat([f_proj, p_proj]) @ W1 == f_proj@w1f + p_proj@w1p.
    h = (jnp.dot(f_proj, w1f_ref[...], preferred_element_type=jnp.float32)
         + jnp.dot(p_proj, w1p_ref[...], preferred_element_type=jnp.float32)
         + b1_ref[...])
    h = jnp.maximum(h, 0.0)                                          # ReLU, f32 [TB, hidden]

    # 2-class softmax == sigmoid(logit0 - logit1). The N=1 matmul is replaced by a
    # VPU multiply + XLU lane reduction (MXU stays free, no masked 1-lane result).
    logit_d = jnp.sum(h * w2d_ref[...], axis=-1, keepdims=True) + b2d_ref[...]  # [TB, 1]
    a0 = jax.nn.sigmoid(logit_d)                                     # weight on f_proj (f32)
    a1 = 1.0 - a0                                                    # weight on p_proj

    # Blend in f32 from bf16 operands, single cast on store.
    out_ref[...] = (a0 * f_proj + a1 * p_proj).astype(out_ref.dtype)


def feature_fusion(f_feat, p_feat, packed, *, tile_b=1024, out_dtype=jnp.bfloat16):
    """f_feat [B, flevel] f32, p_feat [B, plevel] f32, packed: dict from pack_params()."""
    B, flevel_dim = f_feat.shape
    _, plevel_dim = p_feat.shape
    align_dim = packed["wf"].shape[1]
    hidden_dim = packed["b1"].shape[1]

    tile_b = _choose_tile_b(B, tile_b)
    grid = (pl.cdiv(B, tile_b),)   # partial final block is masked by Pallas (no pad/slice)

    out = pl.pallas_call(
        _fusion_kernel,
        out_shape=jax.ShapeDtypeStruct((B, align_dim), out_dtype),
        grid=grid,
        in_specs=[
            pl.BlockSpec((tile_b, flevel_dim), lambda i: (i, 0)),        # batch-tiled inputs
            pl.BlockSpec((tile_b, plevel_dim), lambda i: (i, 0)),
            pl.BlockSpec((flevel_dim, align_dim), lambda i: (0, 0)),     # resident weights
            pl.BlockSpec((plevel_dim, align_dim), lambda i: (0, 0)),
            pl.BlockSpec((1, align_dim), lambda i: (0, 0)),
            pl.BlockSpec((1, align_dim), lambda i: (0, 0)),
            pl.BlockSpec((align_dim, hidden_dim), lambda i: (0, 0)),
            pl.BlockSpec((align_dim, hidden_dim), lambda i: (0, 0)),
            pl.BlockSpec((1, hidden_dim), lambda i: (0, 0)),
            pl.BlockSpec((1, hidden_dim), lambda i: (0, 0)),
            pl.BlockSpec((1, 1), lambda i: (0, 0)),
        ],
        out_specs=pl.BlockSpec((tile_b, align_dim), lambda i: (i, 0)),   # lane-dense [TB, 256]
        compiler_params=pltpu.CompilerParams(
            dimension_semantics=("parallel",),       # megacore sharding on v7x
            vmem_limit_bytes=32 * 1024 * 1024,       # ample for <~8 MiB working set, safe on v7x
        ),
    )(f_feat, p_feat, packed["wf"], packed["wp"], packed["bf"], packed["bp"],
      packed["w1f"], packed["w1p"], packed["b1"], packed["w2d"], packed["b2d"])

    return out


def init_params(key, flevel_dim, plevel_dim, hidden_dim=128, align_dim=256):
    """Raw f32 parameters mirroring the PyTorch module (weights pre-transposed [in, out])."""
    ks = jax.random.split(key, 8)
    s = 0.05
    return {
        "wf": s * jax.random.normal(ks[0], (flevel_dim, align_dim), jnp.float32),
        "bf": s * jax.random.normal(ks[1], (1, align_dim), jnp.float32),
        "wp": s * jax.random.normal(ks[2], (plevel_dim, align_dim), jnp.float32),
        "bp": s * jax.random.normal(ks[3], (1, align_dim), jnp.float32),
        "w1f": s * jax.random.normal(ks[4], (align_dim, hidden_dim), jnp.float32),
        "w1p": s * jax.random.normal(ks[5], (align_dim, hidden_dim), jnp.float32),
        "b1": s * jax.random.normal(ks[6], (1, hidden_dim), jnp.float32),
        "w2": s * jax.random.normal(ks[7], (hidden_dim, 2), jnp.float32),
        "b2": jnp.zeros((1, 2), jnp.float32),
    }


def pack_params(raw):
    """Cast matmul operands to bf16, keep biases f32, fold the 2-class softmax into a
    single logit-difference row (sigmoid trick)."""
    return {
        "wf": raw["wf"].astype(jnp.bfloat16),
        "wp": raw["wp"].astype(jnp.bfloat16),
        "bf": raw["bf"],                                              # f32 [1, align]
        "bp": raw["bp"],                                              # f32 [1, align]
        "w1f": raw["w1f"].astype(jnp.bfloat16),
        "w1p": raw["w1p"].astype(jnp.bfloat16),
        "b1": raw["b1"],                                              # f32 [1, hidden]
        "w2d": (raw["w2"][:, 0] - raw["w2"][:, 1]).reshape(1, -1),    # f32 [1, hidden]
        "b2d": (raw["b2"][:, 0:1] - raw["b2"][:, 1:2]),               # f32 [1, 1]
    }


def _reference(f_feat, p_feat, p):
    f_proj = f_feat @ p["wf"] + p["bf"]
    p_proj = p_feat @ p["wp"] + p["bp"]
    h = jnp.maximum(f_proj @ p["w1f"] + p_proj @ p["w1p"] + p["b1"], 0.0)
    logits = h @ p["w2"] + p["b2"]
    attn = jax.nn.softmax(logits, axis=1)
    return attn[:, 0:1] * f_proj + attn[:, 1:2] * p_proj


if __name__ == "__main__":
    # Small synthetic dims (the CSV-derived flevel_dim/plevel_dim are arbitrary).
    flevel_dim, plevel_dim = 20, 12
    hidden_dim, align_dim = 128, 256

    key = jax.random.PRNGKey(0)
    k_f, k_p, k_w = jax.random.split(key, 3)
    raw = init_params(k_w, flevel_dim, plevel_dim, hidden_dim, align_dim)
    packed = pack_params(raw)

    # Case 1: tiny batch (single tile, partial block).
    B1 = 8
    f1 = jax.random.normal(k_f, (B1, flevel_dim), jnp.float32)
    p1 = jax.random.normal(k_p, (B1, plevel_dim), jnp.float32)
    out1 = jax.block_until_ready(feature_fusion(f1, p1, packed))
    ref1 = _reference(f1, p1, raw)
    assert out1.shape == (B1, align_dim)
    assert jnp.allclose(out1.astype(jnp.float32), ref1, atol=3e-2, rtol=3e-2), \
        "mismatch vs pure-JAX reference (B=8)"

    # Case 2: multiple tiles + masked partial final block (exercises the >=2-tile path).
    B2 = 40
    f2 = jax.random.normal(jax.random.fold_in(k_f, 1), (B2, flevel_dim), jnp.float32)
    p2 = jax.random.normal(jax.random.fold_in(k_p, 1), (B2, plevel_dim), jnp.float32)
    out2 = jax.block_until_ready(feature_fusion(f2, p2, packed))
    ref2 = _reference(f2, p2, raw)
    assert out2.shape == (B2, align_dim)
    assert jnp.allclose(out2.astype(jnp.float32), ref2, atol=3e-2, rtol=3e-2), \
        "mismatch vs pure-JAX reference (B=40, partial tile)"

    print("KERNEL_OK")
</pallas_src>

<mosaic_0001>
module attributes {stable_mosaic.version = 11 : i64} {
  func.func @_fusion_kernel(%arg0: i32, %arg1: memref<16x20xf32, #tpu.memory_space<vmem>>, %arg2: memref<16x12xf32, #tpu.memory_space<vmem>>, %arg3: memref<20x256xbf16, #tpu.memory_space<vmem>>, %arg4: memref<12x256xbf16, #tpu.memory_space<vmem>>, %arg5: memref<1x256xf32, #tpu.memory_space<vmem>>, %arg6: memref<1x256xf32, #tpu.memory_space<vmem>>, %arg7: memref<256x128xbf16, #tpu.memory_space<vmem>>, %arg8: memref<256x128xbf16, #tpu.memory_space<vmem>>, %arg9: memref<1x128xf32, #tpu.memory_space<vmem>>, %arg10: memref<1x128xf32, #tpu.memory_space<vmem>>, %arg11: memref<1x1xf32, #tpu.memory_space<vmem>>, %arg12: memref<16x256xbf16, #tpu.memory_space<vmem>>) attributes {dimension_semantics = [#tpu.dimension_semantics<parallel>], iteration_bounds = array<i64: 1>, scalar_prefetch = 0 : i64, scratch_operands = 0 : i64, tpu.core_type = #tpu.core_type<tc>, window_params = [{transform_indices = @transform_0, window_bounds = array<i64: 16, 20>}, {transform_indices = @transform_1, window_bounds = array<i64: 16, 12>}, {pipeline_mode = #tpu.pipeline_mode<synchronous>, transform_indices = @transform_2, window_bounds = array<i64: 20, 256>}, {pipeline_mode = #tpu.pipeline_mode<synchronous>, transform_indices = @transform_3, window_bounds = array<i64: 12, 256>}, {pipeline_mode = #tpu.pipeline_mode<synchronous>, transform_indices = @transform_4, window_bounds = array<i64: 1, 256>}, {pipeline_mode = #tpu.pipeline_mode<synchronous>, transform_indices = @transform_5, window_bounds = array<i64: 1, 256>}, {pipeline_mode = #tpu.pipeline_mode<synchronous>, transform_indices = @transform_6, window_bounds = array<i64: 256, 128>}, {pipeline_mode = #tpu.pipeline_mode<synchronous>, transform_indices = @transform_7, window_bounds = array<i64: 256, 128>}, {pipeline_mode = #tpu.pipeline_mode<synchronous>, transform_indices = @transform_8, window_bounds = array<i64: 1, 128>}, {pipeline_mode = #tpu.pipeline_mode<synchronous>, transform_indices = @transform_9, window_bounds = array<i64: 1, 128>}, {pipeline_mode = #tpu.pipeline_mode<synchronous>, transform_indices = @transform_10, window_bounds = array<i64: 1, 1>}, {transform_indices = @transform_11, window_bounds = array<i64: 16, 256>}]} {
    %c0 = arith.constant 0 : index
    %c0_0 = arith.constant 0 : index
    %0 = vector.load %arg1[%c0, %c0_0] : memref<16x20xf32, #tpu.memory_space<vmem>>, vector<16x20xf32>
    %1 = arith.truncf %0 : vector<16x20xf32> to vector<16x20xbf16>
    %c0_1 = arith.constant 0 : index
    %c0_2 = arith.constant 0 : index
    %2 = vector.load %arg2[%c0_1, %c0_2] : memref<16x12xf32, #tpu.memory_space<vmem>>, vector<16x12xf32>
    %3 = arith.truncf %2 : vector<16x12xf32> to vector<16x12xbf16>
    %c0_3 = arith.constant 0 : index
    %c0_4 = arith.constant 0 : index
    %4 = vector.load %arg3[%c0_3, %c0_4] : memref<20x256xbf16, #tpu.memory_space<vmem>>, vector<20x256xbf16>
    %cst = arith.constant dense<0.000000e+00> : vector<16x256xf32>
    %5 = tpu.matmul %1, %4, %cst {dimension_numbers = #tpu.dot_dimension_numbers<[1], [0], [0], [1], [0, 0, 1, 1], [], []>} : vector<16x20xbf16>, vector<20x256xbf16>, vector<16x256xf32> -> vector<16x256xf32>
    %c0_5 = arith.constant 0 : index
    %c0_6 = arith.constant 0 : index
    %6 = vector.load %arg5[%c0_5, %c0_6] : memref<1x256xf32, #tpu.memory_space<vmem>>, vector<1x256xf32>
    %7 = vector.broadcast %6 : vector<1x256xf32> to vector<16x256xf32>
    %8 = arith.addf %5, %7 : vector<16x256xf32>
    %9 = arith.truncf %8 : vector<16x256xf32> to vector<16x256xbf16>
    %c0_7 = arith.constant 0 : index
    %c0_8 = arith.constant 0 : index
    %10 = vector.load %arg4[%c0_7, %c0_8] : memref<12x256xbf16, #tpu.memory_space<vmem>>, vector<12x256xbf16>
    %cst_9 = arith.constant dense<0.000000e+00> : vector<16x256xf32>
    %11 = tpu.matmul %3, %10, %cst_9 {dimension_numbers = #tpu.dot_dimension_numbers<[1], [0], [0], [1], [0, 0, 1, 1], [], []>} : vector<16x12xbf16>, vector<12x256xbf16>, vector<16x256xf32> -> vector<16x256xf32>
    %c0_10 = arith.constant 0 : index
    %c0_11 = arith.constant 0 : index
    %12 = vector.load %arg6[%c0_10, %c0_11] : memref<1x256xf32, #tpu.memory_space<vmem>>, vector<1x256xf32>
    %13 = vector.broadcast %12 : vector<1x256xf32> to vector<16x256xf32>
    %14 = arith.addf %11, %13 : vector<16x256xf32>
    %15 = arith.truncf %14 : vector<16x256xf32> to vector<16x256xbf16>
    %c0_12 = arith.constant 0 : index
    %c0_13 = arith.constant 0 : index
    %16 = vector.load %arg7[%c0_12, %c0_13] : memref<256x128xbf16, #tpu.memory_space<vmem>>, vector<256x128xbf16>
    %cst_14 = arith.constant dense<0.000000e+00> : vector<16x128xf32>
    %17 = tpu.matmul %9, %16, %cst_14 {dimension_numbers = #tpu.dot_dimension_numbers<[1], [0], [0], [1], [0, 0, 1, 1], [], []>} : vector<16x256xbf16>, vector<256x128xbf16>, vector<16x128xf32> -> vector<16x128xf32>
    %c0_15 = arith.constant 0 : index
    %c0_16 = arith.constant 0 : index
    %18 = vector.load %arg8[%c0_15, %c0_16] : memref<256x128xbf16, #tpu.memory_space<vmem>>, vector<256x128xbf16>
    %cst_17 = arith.constant dense<0.000000e+00> : vector<16x128xf32>
    %19 = tpu.matmul %15, %18, %cst_17 {dimension_numbers = #tpu.dot_dimension_numbers<[1], [0], [0], [1], [0, 0, 1, 1], [], []>} : vector<16x256xbf16>, vector<256x128xbf16>, vector<16x128xf32> -> vector<16x128xf32>
    %20 = arith.addf %17, %19 : vector<16x128xf32>
    %c0_18 = arith.constant 0 : index
    %c0_19 = arith.constant 0 : index
    %21 = vector.load %arg9[%c0_18, %c0_19] : memref<1x128xf32, #tpu.memory_space<vmem>>, vector<1x128xf32>
    %22 = vector.broadcast %21 : vector<1x128xf32> to vector<16x128xf32>
    %23 = arith.addf %20, %22 : vector<16x128xf32>
    %cst_20 = arith.constant 0.000000e+00 : f32
    %24 = vector.broadcast %cst_20 : f32 to vector<16x128xf32>
    %25 = arith.maximumf %23, %24 : vector<16x128xf32>
    %c0_21 = arith.constant 0 : index
    %c0_22 = arith.constant 0 : index
    %26 = vector.load %arg10[%c0_21, %c0_22] : memref<1x128xf32, #tpu.memory_space<vmem>>, vector<1x128xf32>
    %27 = vector.broadcast %26 : vector<1x128xf32> to vector<16x128xf32>
    %28 = arith.mulf %25, %27 : vector<16x128xf32>
    %cst_23 = arith.constant dense<0.000000e+00> : vector<16xf32>
    %29 = vector.multi_reduction <add>, %28, %cst_23 [1] : vector<16x128xf32> to vector<16xf32>
    %30 = vector.shape_cast %29 : vector<16xf32> to vector<16x1xf32>
    %c0_24 = arith.constant 0 : index
    %c0_25 = arith.constant 0 : index
    %31 = vector.load %arg11[%c0_24, %c0_25] : memref<1x1xf32, #tpu.memory_space<vmem>>, vector<1x1xf32>
    %32 = vector.broadcast %31 : vector<1x1xf32> to vector<16x1xf32>
    %33 = arith.addf %30, %32 : vector<16x1xf32>
    %34 = arith.negf %33 : vector<16x1xf32>
    %35 = math.exp %34 : vector<16x1xf32>
    %cst_26 = arith.constant 1.000000e+00 : f32
    %36 = vector.broadcast %cst_26 : f32 to vector<16x1xf32>
    %37 = arith.addf %36, %35 : vector<16x1xf32>
    %38 = arith.divf %36, %37 : vector<16x1xf32>
    %cst_27 = arith.constant 1.000000e+00 : f32
    %39 = vector.broadcast %cst_27 : f32 to vector<16x1xf32>
    %40 = arith.subf %39, %38 : vector<16x1xf32>
    %41 = arith.extf %9 : vector<16x256xbf16> to vector<16x256xf32>
    %42 = vector.broadcast %38 : vector<16x1xf32> to vector<16x256xf32>
    %43 = arith.mulf %42, %41 : vector<16x256xf32>
    %44 = arith.extf %15 : vector<16x256xbf16> to vector<16x256xf32>
    %45 = vector.broadcast %40 : vector<16x1xf32> to vector<16x256xf32>
    %46 = arith.mulf %45, %44 : vector<16x256xf32>
    %47 = arith.addf %43, %46 : vector<16x256xf32>
    %48 = arith.truncf %47 : vector<16x256xf32> to vector<16x256xbf16>
    %c0_28 = arith.constant 0 : index
    %c0_29 = arith.constant 0 : index
    %49 = vector.load %arg12[%c0_28, %c0_29] : memref<16x256xbf16, #tpu.memory_space<vmem>>, vector<16x256xbf16>
    tpu.vector_store %arg12[%c0_28, %c0_29], %48 {strides = array<i32>} : memref<16x256xbf16, #tpu.memory_space<vmem>>, vector<16x256xbf16>,
    return
  }
  func.func @transform_0(%arg0: i32) -> (i32, i32) {
    %c0_i32 = arith.constant 0 : i32
    %c0_i32_0 = arith.constant 0 : i32
    return %arg0, %c0_i32 : i32, i32
  }
  func.func @transform_1(%arg0: i32) -> (i32, i32) {
    %c0_i32 = arith.constant 0 : i32
    %c0_i32_0 = arith.constant 0 : i32
    return %arg0, %c0_i32 : i32, i32
  }
  func.func @transform_2(%arg0: i32) -> (i32, i32) {
    %c0_i32 = arith.constant 0 : i32
    %c0_i32_0 = arith.constant 0 : i32
    %c0_i32_1 = arith.constant 0 : i32
    return %c0_i32, %c0_i32_0 : i32, i32
  }
  func.func @transform_3(%arg0: i32) -> (i32, i32) {
    %c0_i32 = arith.constant 0 : i32
    %c0_i32_0 = arith.constant 0 : i32
    %c0_i32_1 = arith.constant 0 : i32
    return %c0_i32, %c0_i32_0 : i32, i32
  }
  func.func @transform_4(%arg0: i32) -> (i32, i32) {
    %c0_i32 = arith.constant 0 : i32
    %c0_i32_0 = arith.constant 0 : i32
    %c0_i32_1 = arith.constant 0 : i32
    return %c0_i32, %c0_i32_0 : i32, i32
  }
  func.func @transform_5(%arg0: i32) -> (i32, i32) {
    %c0_i32 = arith.constant 0 : i32
    %c0_i32_0 = arith.constant 0 : i32
    %c0_i32_1 = arith.constant 0 : i32
    return %c0_i32, %c0_i32_0 : i32, i32
  }
  func.func @transform_6(%arg0: i32) -> (i32, i32) {
    %c0_i32 = arith.constant 0 : i32
    %c0_i32_0 = arith.constant 0 : i32
    %c0_i32_1 = arith.constant 0 : i32
    return %c0_i32, %c0_i32_0 : i32, i32
  }
  func.func @transform_7(%arg0: i32) -> (i32, i32) {
    %c0_i32 = arith.constant 0 : i32
    %c0_i32_0 = arith.constant 0 : i32
    %c0_i32_1 = arith.constant 0 : i32
    return %c0_i32, %c0_i32_0 : i32, i32
  }
  func.func @transform_8(%arg0: i32) -> (i32, i32) {
    %c0_i32 = arith.constant 0 : i32
    %c0_i32_0 = arith.constant 0 : i32
    %c0_i32_1 = arith.constant 0 : i32
    return %c0_i32, %c0_i32_0 : i32, i32
  }
  func.func @transform_9(%arg0: i32) -> (i32, i32) {
    %c0_i32 = arith.constant 0 : i32
    %c0_i32_0 = arith.constant 0 : i32
    %c0_i32_1 = arith.constant 0 : i32
    return %c0_i32, %c0_i32_0 : i32, i32
  }
  func.func @transform_10(%arg0: i32) -> (i32, i32) {
    %c0_i32 = arith.constant 0 : i32
    %c0_i32_0 = arith.constant 0 : i32
    %c0_i32_1 = arith.constant 0 : i32
    return %c0_i32, %c0_i32_0 : i32, i32
  }
  func.func @transform_11(%arg0: i32) -> (i32, i32) {
    %c0_i32 = arith.constant 0 : i32
    %c0_i32_0 = arith.constant 0 : i32
    return %arg0, %c0_i32 : i32, i32
  }
}

</mosaic_0001>

<llo_original>
// kernel: tpu_custom_call.1
$region0: #{tpu_custom_call.1}
  #allocation0 [shape = 'u32[]', space=smem, size = 0x4, offset = 0x4, fixed_abs, tag = 'smem constant byte address 0x4 - core index']
  #allocation1 [shape = 'u32[144,128]{1,0:T(1,128)}', space=vmem, size = 0x12000, scoped, tag = 'internal scratch']
  #allocation2 [shape = 'f32[1,1]{1,0:T(1,128)S(1)}', space=vmem, size = 0x200, scoped, tag = 'scoped memory for tpu_custom_call.1']
  %s0 = inlined_call_operand.hbm [shape: f32[8,20], index: 0, kind: input, shape index: {}]
  %s1 = inlined_call_operand.hbm [shape: f32[8,12], index: 1, kind: input, shape index: {}]
  %s2 = inlined_call_operand.hbm [shape: bf16[20,256], index: 2, kind: input, shape index: {}]
  %s3 = inlined_call_operand.hbm [shape: bf16[12,256], index: 3, kind: input, shape index: {}]
  %s4 = inlined_call_operand.vmem [shape: f32[1,256], index: 4, kind: input, shape index: {}]
  %s5 = inlined_call_operand.vmem [shape: f32[1,256], index: 5, kind: input, shape index: {}]
  %s6 = inlined_call_operand.hbm [shape: bf16[256,128], index: 6, kind: input, shape index: {}]
  %s7 = inlined_call_operand.hbm [shape: bf16[256,128], index: 7, kind: input, shape index: {}]
  %s8 = inlined_call_operand.vmem [shape: f32[1,128], index: 8, kind: input, shape index: {}]
  %s9 = inlined_call_operand.vmem [shape: f32[1,128], index: 9, kind: input, shape index: {}]
  %s10 = inlined_call_operand.<no memory space> [shape: f32[1,1], index: 10, kind: input, shape index: {}]
  %s11 = inlined_call_operand.hbm [shape: bf16[8,256], index: 11, kind: output, shape index: {}]
  %s12 = sld [smem:[#allocation0]]
  $region78: #{tpu_custom_call.1} parent=0
    _
  %s14 = ssub.s32 1, %s12
  %s15 = scalar_select 0, %s14, %s12
  %v16 = vstv %s10
  %17 = vst [vmem:[#allocation2] sm:$0x1] %v16
  $region1: #{tpu_custom_call.1} parent=0
    #allocation3 [shape = 'u8[8192]{0}', space=vmem, size = 0x2000, scoped, tag = 'input window, operand 0, single buffered']
    #allocation4 [shape = 's32[1]{0}', space=sflag, size = 0x4, scoped, tag = 'scoped memory for tpu_custom_call.1']
    #allocation5 [shape = 's32[1]{0}', space=sflag, size = 0x4, scoped, tag = 'scoped memory for tpu_custom_call.1']
    #allocation6 [shape = 'u8[8192]{0}', space=vmem, size = 0x2000, scoped, tag = 'input window, operand 1, single buffered']
    #allocation7 [shape = 's32[1]{0}', space=sflag, size = 0x4, scoped, tag = 'scoped memory for tpu_custom_call.1']
    #allocation8 [shape = 'u8[12288]{0}', space=vmem, size = 0x3000, scoped, tag = 'input window, operand 2, single buffered']
    #allocation9 [shape = 'u8[8192]{0}', space=vmem, size = 0x2000, scoped, tag = 'input window, operand 3, single buffered']
    #allocation10 [shape = 's32[1]{0}', space=sflag, size = 0x4, scoped, tag = 'scoped memory for tpu_custom_call.1']
    #allocation11 [shape = 'u8[65536]{0}', space=vmem, size = 0x10000, scoped, tag = 'input window, operand 6, single buffered']
    #allocation12 [shape = 'u8[65536]{0}', space=vmem, size = 0x10000, scoped, tag = 'input window, operand 7, single buffered']
    #allocation13 [shape = 's32[1]{0}', space=sflag, size = 0x4, scoped, tag = 'scoped memory for tpu_custom_call.1']
    #allocation14 [shape = 'u8[8192]{0}', space=vmem, size = 0x2000, scoped, tag = 'output window, operand 0, single buffered']
    %18 = vsyncpa [#allocation4], 0
    %19 = vsyncpa [#allocation7], 0
    %20 = vsyncpa [#allocation10], 0
    %21 = vsyncpa [#allocation13], 0
    %22 = vsyncpa [#allocation5], 0
    // Predicated region
    $region2: #{tpu_custom_call.1} parent=1 // pred_check
      _
    $region3: #{tpu_custom_call.1} parent=1 // pred_check_branch
      %24 = sbr.rel (0) target = $region5
    $region4: #{tpu_custom_call.1} parent=1 // pred_region
      %s26 = ssub.s32 256, 128
      %27 = vsyncadd [#allocation4], %s26
      %s28 = sshll.u32 [#allocation3], 4
      %s29 = int_to_ptr.vmem [resolvable:$true] %s28
      %34 = dma.hbm_to_vmem [thread:$0]  %s0, 128, %s29, [#allocation4], 128, 128, 8
    $region5: #{tpu_custom_call.1} parent=1 // pred_fallthru
      _
    // Predicated region
    $region6: #{tpu_custom_call.1} parent=1 // pred_check
      _
    $region7: #{tpu_custom_call.1} parent=1 // pred_check_branch
      %36 = sbr.rel (0) target = $region9
    $region8: #{tpu_custom_call.1} parent=1 // pred_region
      %s38 = ssub.s32 256, 128
      %39 = vsyncadd [#allocation7], %s38
      %s40 = sshll.u32 [#allocation6], 4
      %s41 = int_to_ptr.vmem [resolvable:$true] %s40
      %46 = dma.hbm_to_vmem [thread:$0]  %s1, 128, %s41, [#allocation7], 128, 128, 8
    $region9: #{tpu_custom_call.1} parent=1 // pred_fallthru
      _
    // Predicated region
    $region10: #{tpu_custom_call.1} parent=1 // pred_check
      _
    $region11: #{tpu_custom_call.1} parent=1 // pred_check_branch
      %48 = sbr.rel (0) target = $region13
    $region12: #{tpu_custom_call.1} parent=1 // pred_region
      %s50 = ssub.s32 384, 384
      %51 = vsyncadd [#allocation7], %s50
      %s52 = sshll.u32 [#allocation8], 4
      %s53 = int_to_ptr.vmem [resolvable:$true] %s52
      %58 = dma.hbm_to_vmem [thread:$0]  %s2, 384, %s53, [#allocation7], 128, 128, 8
    $region13: #{tpu_custom_call.1} parent=1 // pred_fallthru
      _
    // Predicated region
    $region14: #{tpu_custom_call.1} parent=1 // pred_check
      _
    $region15: #{tpu_custom_call.1} parent=1 // pred_check_branch
      %60 = sbr.rel (0) target = $region17
    $region16: #{tpu_custom_call.1} parent=1 // pred_region
      %s62 = ssub.s32 256, 256
      %63 = vsyncadd [#allocation10], %s62
      %s64 = sshll.u32 [#allocation9], 4
      %s65 = int_to_ptr.vmem [resolvable:$true] %s64
      %70 = dma.hbm_to_vmem [thread:$0]  %s3, 256, %s65, [#allocation10], 128, 128, 8
    $region17: #{tpu_custom_call.1} parent=1 // pred_fallthru
      _
    // Predicated region
    $region18: #{tpu_custom_call.1} parent=1 // pred_check
      _
    $region19: #{tpu_custom_call.1} parent=1 // pred_check_branch
      %72 = sbr.rel (0) target = $region21
    $region20: #{tpu_custom_call.1} parent=1 // pred_region
      _
    $region21: #{tpu_custom_call.1} parent=1 // pred_fallthru
      _
    // Predicated region
    $region22: #{tpu_custom_call.1} parent=1 // pred_check
      _
    $region23: #{tpu_custom_call.1} parent=1 // pred_check_branch
      %74 = sbr.rel (0) target = $region25
    $region24: #{tpu_custom_call.1} parent=1 // pred_region
      _
    $region25: #{tpu_custom_call.1} parent=1 // pred_fallthru
      _
    // Predicated region
    $region26: #{tpu_custom_call.1} parent=1 // pred_check
      _
    $region27: #{tpu_custom_call.1} parent=1 // pred_check_branch
      %76 = sbr.rel (0) target = $region29
    $region28: #{tpu_custom_call.1} parent=1 // pred_region
      %s78 = ssub.s32 2048, 2048
      %79 = vsyncadd [#allocation10], %s78
      %s80 = sshll.u32 [#allocation11], 4
      %s81 = int_to_ptr.vmem [resolvable:$true] %s80
      %86 = dma.hbm_to_vmem [thread:$0]  %s6, 2048, %s81, [#allocation10], 64, 64, 4
    $region29: #{tpu_custom_call.1} parent=1 // pred_fallthru
      _
    // Predicated region
    $region30: #{tpu_custom_call.1} parent=1 // pred_check
      _
    $region31: #{tpu_custom_call.1} parent=1 // pred_check_branch
      %88 = sbr.rel (0) target = $region33
    $region32: #{tpu_custom_call.1} parent=1 // pred_region
      %s90 = ssub.s32 2048, 2048
      %91 = vsyncadd [#allocation13], %s90
      %s92 = sshll.u32 [#allocation12], 4
      %s93 = int_to_ptr.vmem [resolvable:$true] %s92
      %98 = dma.hbm_to_vmem [thread:$0]  %s7, 2048, %s93, [#allocation13], 64, 64, 4
    $region33: #{tpu_custom_call.1} parent=1 // pred_fallthru
      _
    // Predicated region
    $region34: #{tpu_custom_call.1} parent=1 // pred_check
      _
    $region35: #{tpu_custom_call.1} parent=1 // pred_check_branch
      %100 = sbr.rel (0) target = $region37
    $region36: #{tpu_custom_call.1} parent=1 // pred_region
      _
    $region37: #{tpu_custom_call.1} parent=1 // pred_fallthru
      _
    // Predicated region
    $region38: #{tpu_custom_call.1} parent=1 // pred_check
      _
    $region39: #{tpu_custom_call.1} parent=1 // pred_check_branch
      %102 = sbr.rel (0) target = $region41
    $region40: #{tpu_custom_call.1} parent=1 // pred_region
      _
    $region41: #{tpu_custom_call.1} parent=1 // pred_fallthru
      _
    // Predicated region
    $region42: #{tpu_custom_call.1} parent=1 // pred_check
      _
    $region43: #{tpu_custom_call.1} parent=1 // pred_check_branch
      %104 = sbr.rel (0) target = $region45
    $region44: #{tpu_custom_call.1} parent=1 // pred_region
      _
    $region45: #{tpu_custom_call.1} parent=1 // pred_fallthru
      _
    // Predicated region
    $region46: #{tpu_custom_call.1} parent=1 // pred_check
      _
    $region47: #{tpu_custom_call.1} parent=1 // pred_check_branch
      %106 = sbr.rel (0) target = $region49
    $region48: #{tpu_custom_call.1} parent=1 // pred_region
      %107 = dma.done [#allocation4], 256
    $region49: #{tpu_custom_call.1} parent=1 // pred_fallthru
      _
    // Predicated region
    $region50: #{tpu_custom_call.1} parent=1 // pred_check
      _
    $region51: #{tpu_custom_call.1} parent=1 // pred_check_branch
      %109 = sbr.rel (0) target = $region53
    $region52: #{tpu_custom_call.1} parent=1 // pred_region
      %110 = dma.done [#allocation7], 256
    $region53: #{tpu_custom_call.1} parent=1 // pred_fallthru
      _
    // Predicated region
    $region54: #{tpu_custom_call.1} parent=1 // pred_check
      _
    $region55: #{tpu_custom_call.1} parent=1 // pred_check_branch
      %112 = sbr.rel (0) target = $region57
    $region56: #{tpu_custom_call.1} parent=1 // pred_region
      %113 = dma.done [#allocation7], 384
    $region57: #{tpu_custom_call.1} parent=1 // pred_fallthru
      _
    // Predicated region
    $region58: #{tpu_custom_call.1} parent=1 // pred_check
      _
    $region59: #{tpu_custom_call.1} parent=1 // pred_check_branch
      %115 = sbr.rel (0) target = $region61
    $region60: #{tpu_custom_call.1} parent=1 // pred_region
      %116 = dma.done [#allocation10], 256
    $region61: #{tpu_custom_call.1} parent=1 // pred_fallthru
      _
    // Predicated region
    $region62: #{tpu_custom_call.1} parent=1 // pred_check
      _
    $region63: #{tpu_custom_call.1} parent=1 // pred_check_branch
      %118 = sbr.rel (0) target = $region65
    $region64: #{tpu_custom_call.1} parent=1 // pred_region
      %119 = dma.done [#allocation10], 2048
    $region65: #{tpu_custom_call.1} parent=1 // pred_fallthru
      _
    // Predicated region
    $region66: #{tpu_custom_call.1} parent=1 // pred_check
      _
    $region67: #{tpu_custom_call.1} parent=1 // pred_check_branch
      %121 = sbr.rel (0) target = $region69
    $region68: #{tpu_custom_call.1} parent=1 // pred_region
      %122 = dma.done [#allocation13], 2048
    $region69: #{tpu_custom_call.1} parent=1 // pred_fallthru
      _
    %v124 = vld [vmem:[#allocation3] sm:$0xff]
    %v125 = vld [vmem:[#allocation3 + $0x8] sm:$0xff]
    %v126 = vpack.c.bf16 %v125, %v124
    %v127 = vld [vmem:[#allocation6] sm:$0xff]
    %v128 = vld [vmem:[#allocation6 + $0x8] sm:$0xff]
    %v129 = vpack.c.bf16 %v128, %v127
    %v130 = vld [vmem:[#allocation8] sm:$0xff]
    %v131 = vld [vmem:[#allocation8 + $0x8] sm:$0xff]
    %v132 = vld [vmem:[#allocation8 + $0x10] sm:$0x33]
    %v133 = vld [vmem:[%s4] sm:$0x3]
    %v135 = vlaneseq
    %v136 = vshrl.u32 %v135, 7
    %v137 = vsub.s32 0, %v136
    %v138 = vrot.slane %v133, %v137
    %v139 = vlaneseq
    %v140 = vshrl.u32 %v139, 7
    %v141 = vsub.s32 1, %v140
    %v142 = vrot.slane %v133, %v141
    %v148 = vunpack.c.l.b16 %v130
    %v149 = vunpack.c.h.b16 %v130
    %v150 = vunpack.c.l.b16 %v131
    %v151 = vunpack.c.h.b16 %v131
    %v152 = vunpack.c.l.b16 %v132
    %v153 = vunpack.c.h.b16 %v132
    %v154 = vpack.c.b16 %v150, %v148
    %v155 = vpack.c.b16 %v151, %v149
    %v156 = vpack.c.b16 %v152, %v152
    %v157 = vpack.c.b16 %v153, %v153
    %vm160 = vcmask 162816
    %v162 = vsel %vm160, %v126, 0
    %vm164 = vcmask 1041408
    %v166 = vsel %vm164, %v156, 0
    %v169 = vsel %vm164, %v157, 0
    %171 = vmatprep.subr.bf16.mxu0 %v155
    %172 = vmatpush1.bf16.msra.mxu0 %v154
    %173 = vmatprep.subr.bf16.mxu0 %v169
    %174 = vmatpush1.bf16.msra.mxu0 %v166
    %175 = vmatprep.subr.bf16.mxu0 0
    %176 = vmatpush1.bf16.msra.mxu0 0
    %177 = vmatprep.subr.bf16.mxu0 0
    %178 = vmatpush1.bf16.msra.mxu0 0
    %179 = vmatprep.subr.bf16.mxu0 0
    %180 = vmatpush1.bf16.msra.mxu0 0
    %181 = vmatprep.subr.bf16.mxu0 0
    %182 = vmatpush1.bf16.msra.mxu0 0
    %183 = vmatprep.subr.bf16.mxu0 0
    %184 = vmatpush1.bf16.msra.mxu0 0
    %185 = vmatprep.subr.bf16.mxu0 0
    %186 = vmatpush1.bf16.msra.mxu0 0
    %187 = vmatprep.subr.bf16.mxu0 0
    %188 = vmatpush1.bf16.msra.mxu0 0
    %189 = vmatprep.subr.bf16.mxu0 0
    %190 = vmatpush1.bf16.msra.mxu0 0
    %191 = vmatprep.subr.bf16.mxu0 0
    %192 = vmatpush1.bf16.msra.mxu0 0
    %193 = vmatprep.subr.bf16.mxu0 0
    %194 = vmatpush1.bf16.msra.mxu0 0
    %195 = vmatprep.subr.bf16.mxu0 0
    %196 = vmatpush1.bf16.msra.mxu0 0
    %197 = vmatprep.subr.bf16.mxu0 0
    %198 = vmatpush1.bf16.msra.mxu0 0
    %199 = vmatprep.subr.bf16.mxu0 0
    %200 = vmatpush1.bf16.msra.mxu0 0
    %201 = vmatprep.subr.bf16.mxu0 0
    %202 = vmatpush1.bf16.msra.mxu0 0
    %203 = vmatprep.mubr.bf16.mxu0 0
    %204 = vmatmul.mubr.bf16.gmra.mrb[0].mxu0 %v162
    %v205 = vpop.f32.mrb[0].mxu0
    %v206 = vadd.f32 %v138, %v205
    %v207 = vpop.f32.mrb[0].mxu0
    %v208 = vadd.f32 %v142, %v207
    %v209 = vpop.f32.mrb[0].mxu0
    %v210 = vadd.f32 %v138, %v209
    %v211 = vpop.f32.mrb[0].mxu0
    %v212 = vadd.f32 %v142, %v211
    %213 = vdwg.mxu0
    %v214 = vpack.c.bf16 %v210, %v206
    %v215 = vpack.c.bf16 %v212, %v208
    %v216 = vld [vmem:[#allocation9] sm:$0xff]
    %v217 = vld [vmem:[#allocation9 + $0x8] sm:$0x33]
    %v218 = vld [vmem:[%s5] sm:$0x3]
    %v220 = vlaneseq
    %v221 = vshrl.u32 %v220, 7
    %v222 = vsub.s32 0, %v221
    %v223 = vrot.slane %v218, %v222
    %v224 = vlaneseq
    %v225 = vshrl.u32 %v224, 7
    %v226 = vsub.s32 1, %v225
    %v227 = vrot.slane %v218, %v226
    %v232 = vunpack.c.l.b16 %v216
    %v233 = vunpack.c.h.b16 %v216
    %v234 = vunpack.c.l.b16 %v217
    %v235 = vunpack.c.h.b16 %v217
    %v236 = vpack.c.b16 %v234, %v232
    %v237 = vpack.c.b16 %v235, %v233
    %vm238 = vcmask 97280
    %v240 = vsel %vm238, %v129, 0
    %vm242 = vcmask 1045504
    %v244 = vsel %vm242, %v236, 0
    %v247 = vsel %vm242, %v237, 0
    %249 = vmatprep.subr.bf16.mxu0 %v247
    %250 = vmatpush1.bf16.msra.mxu0 %v244
    %251 = vmatprep.subr.bf16.mxu0 0
    %252 = vmatpush1.bf16.msra.mxu0 0
    %253 = vmatprep.subr.bf16.mxu0 0
    %254 = vmatpush1.bf16.msra.mxu0 0
    %255 = vmatprep.subr.bf16.mxu0 0
    %256 = vmatpush1.bf16.msra.mxu0 0
    %257 = vmatprep.subr.bf16.mxu0 0
    %258 = vmatpush1.bf16.msra.mxu0 0
    %259 = vmatprep.subr.bf16.mxu0 0
    %260 = vmatpush1.bf16.msra.mxu0 0
    %261 = vmatprep.subr.bf16.mxu0 0
    %262 = vmatpush1.bf16.msra.mxu0 0
    %263 = vmatprep.subr.bf16.mxu0 0
    %264 = vmatpush1.bf16.msra.mxu0 0
    %265 = vmatprep.subr.bf16.mxu0 0
    %266 = vmatpush1.bf16.msra.mxu0 0
    %267 = vmatprep.subr.bf16.mxu0 0
    %268 = vmatpush1.bf16.msra.mxu0 0
    %269 = vmatprep.subr.bf16.mxu0 0
    %270 = vmatpush1.bf16.msra.mxu0 0
    %271 = vmatprep.subr.bf16.mxu0 0
    %272 = vmatpush1.bf16.msra.mxu0 0
    %273 = vmatprep.subr.bf16.mxu0 0
    %274 = vmatpush1.bf16.msra.mxu0 0
    %275 = vmatprep.subr.bf16.mxu0 0
    %276 = vmatpush1.bf16.msra.mxu0 0
    %277 = vmatprep.subr.bf16.mxu0 0
    %278 = vmatpush1.bf16.msra.mxu0 0
    %279 = vmatprep.subr.bf16.mxu0 0
    %280 = vmatpush1.bf16.msra.mxu0 0
    %281 = vmatprep.mubr.bf16.mxu0 0
    %282 = vmatmul.mubr.bf16.gmra.mrb[0].mxu0 %v240
    %v283 = vpop.f32.mrb[0].mxu0
    %v284 = vadd.f32 %v223, %v283
    %v285 = vpop.f32.mrb[0].mxu0
    %v286 = vadd.f32 %v227, %v285
    %v287 = vpop.f32.mrb[0].mxu0
    %v288 = vadd.f32 %v223, %v287
    %v289 = vpop.f32.mrb[0].mxu0
    %v290 = vadd.f32 %v227, %v289
    %291 = vdwg.mxu0
    %v292 = vpack.c.bf16 %v288, %v284
    %v293 = vpack.c.bf16 %v290, %v286
    %v294 = vld [vmem:[#allocation11] sm:$0xf]
    %v295 = vld [vmem:[#allocation11 + $0x4] sm:$0xf]
    %v296 = vld [vmem:[#allocation11 + $0x8] sm:$0xf]
    %v297 = vld [vmem:[#allocation11 + $0xc] sm:$0xf]
    %v298 = vld [vmem:[#allocation11 + $0x10] sm:$0xf]
    %v299 = vld [vmem:[#allocation11 + $0x14] sm:$0xf]
    %v300 = vld [vmem:[#allocation11 + $0x18] sm:$0xf]
    %v301 = vld [vmem:[#allocation11 + $0x1c] sm:$0xf]
    %v302 = vld [vmem:[#allocation11 + $0x20] sm:$0xf]
    %v303 = vld [vmem:[#allocation11 + $0x24] sm:$0xf]
    %v304 = vld [vmem:[#allocation11 + $0x28] sm:$0xf]
    %v305 = vld [vmem:[#allocation11 + $0x2c] sm:$0xf]
    %v306 = vld [vmem:[#allocation11 + $0x30] sm:$0xf]
    %v307 = vld [vmem:[#allocation11 + $0x34] sm:$0xf]
    %v308 = vld [vmem:[#allocation11 + $0x38] sm:$0xf]
    %v309 = vld [vmem:[#allocation11 + $0x3c] sm:$0xf]
    %v310 = vld [vmem:[#allocation11 + $0x40] sm:$0xf]
    %v311 = vld [vmem:[#allocation11 + $0x44] sm:$0xf]
    %v312 = vld [vmem:[#allocation11 + $0x48] sm:$0xf]
    %v313 = vld [vmem:[#allocation11 + $0x4c] sm:$0xf]
    %v314 = vld [vmem:[#allocation11 + $0x50] sm:$0xf]
    %v315 = vld [vmem:[#allocation11 + $0x54] sm:$0xf]
    %v316 = vld [vmem:[#allocation11 + $0x58] sm:$0xf]
    %v317 = vld [vmem:[#allocation11 + $0x5c] sm:$0xf]
    %v318 = vld [vmem:[#allocation11 + $0x60] sm:$0xf]
    %v319 = vld [vmem:[#allocation11 + $0x64] sm:$0xf]
    %v320 = vld [vmem:[#allocation11 + $0x68] sm:$0xf]
    %v321 = vld [vmem:[#allocation11 + $0x6c] sm:$0xf]
    %v322 = vld [vmem:[#allocation11 + $0x70] sm:$0xf]
    %v323 = vld [vmem:[#allocation11 + $0x74] sm:$0xf]
    %v324 = vld [vmem:[#allocation11 + $0x78] sm:$0xf]
    %v325 = vld [vmem:[#allocation11 + $0x7c] sm:$0xf]
    %v326 = vld [vmem:[#allocation12] sm:$0xf]
    %v327 = vld [vmem:[#allocation12 + $0x4] sm:$0xf]
    %v328 = vld [vmem:[#allocation12 + $0x8] sm:$0xf]
    %v329 = vld [vmem:[#allocation12 + $0xc] sm:$0xf]
    %v330 = vld [vmem:[#allocation12 + $0x10] sm:$0xf]
    %v331 = vld [vmem:[#allocation12 + $0x14] sm:$0xf]
    %v332 = vld [vmem:[#allocation12 + $0x18] sm:$0xf]
    %v333 = vld [vmem:[#allocation12 + $0x1c] sm:$0xf]
    %v334 = vld [vmem:[#allocation12 + $0x20] sm:$0xf]
    %v335 = vld [vmem:[#allocation12 + $0x24] sm:$0xf]
    %v336 = vld [vmem:[#allocation12 + $0x28] sm:$0xf]
    %v337 = vld [vmem:[#allocation12 + $0x2c] sm:$0xf]
    %v338 = vld [vmem:[#allocation12 + $0x30] sm:$0xf]
    %v339 = vld [vmem:[#allocation12 + $0x34] sm:$0xf]
    %v340 = vld [vmem:[#allocation12 + $0x38] sm:$0xf]
    %v341 = vld [vmem:[#allocation12 + $0x3c] sm:$0xf]
    %v342 = vld [vmem:[#allocation12 + $0x40] sm:$0xf]
    %v343 = vld [vmem:[#allocation12 + $0x44] sm:$0xf]
    %v344 = vld [vmem:[#allocation12 + $0x48] sm:$0xf]
    %v345 = vld [vmem:[#allocation12 + $0x4c] sm:$0xf]
    %v346 = vld [vmem:[#allocation12 + $0x50] sm:$0xf]
    %v347 = vld [vmem:[#allocation12 + $0x54] sm:$0xf]
    %v348 = vld [vmem:[#allocation12 + $0x58] sm:$0xf]
    %v349 = vld [vmem:[#allocation12 + $0x5c] sm:$0xf]
    %v350 = vld [vmem:[#allocation12 + $0x60] sm:$0xf]
    %v351 = vld [vmem:[#allocation12 + $0x64] sm:$0xf]
    %v352 = vld [vmem:[#allocation12 + $0x68] sm:$0xf]
    %v353 = vld [vmem:[#allocation12 + $0x6c] sm:$0xf]
    %v354 = vld [vmem:[#allocation12 + $0x70] sm:$0xf]
    %v355 = vld [vmem:[#allocation12 + $0x74] sm:$0xf]
    %v356 = vld [vmem:[#allocation12 + $0x78] sm:$0xf]
    %v357 = vld [vmem:[#allocation12 + $0x7c] sm:$0xf]
    %v390 = vunpack.c.l.b16 %v326
    %v391 = vunpack.c.l.b16 %v327
    %v392 = vunpack.c.l.b16 %v328
    %v393 = vunpack.c.l.b16 %v329
    %v394 = vunpack.c.l.b16 %v330
    %v395 = vunpack.c.l.b16 %v331
    %v396 = vunpack.c.l.b16 %v332
    %v397 = vunpack.c.l.b16 %v333
    %v398 = vunpack.c.l.b16 %v334
    %v399 = vunpack.c.l.b16 %v335
    %v400 = vunpack.c.l.b16 %v336
    %v401 = vunpack.c.l.b16 %v337
    %v402 = vunpack.c.l.b16 %v338
    %v403 = vunpack.c.l.b16 %v339
    %v404 = vunpack.c.l.b16 %v340
    %v405 = vunpack.c.l.b16 %v341
    %v406 = vunpack.c.l.b16 %v342
    %v407 = vunpack.c.l.b16 %v343
    %v408 = vunpack.c.l.b16 %v344
    %v409 = vunpack.c.l.b16 %v345
    %v410 = vunpack.c.l.b16 %v346
    %v411 = vunpack.c.l.b16 %v347
    %v412 = vunpack.c.l.b16 %v348
    %v413 = vunpack.c.l.b16 %v349
    %v414 = vunpack.c.l.b16 %v350
    %v415 = vunpack.c.l.b16 %v351
    %v416 = vunpack.c.l.b16 %v352
    %v417 = vunpack.c.l.b16 %v353
    %v418 = vunpack.c.l.b16 %v354
    %v419 = vunpack.c.l.b16 %v355
    %v420 = vunpack.c.l.b16 %v356
    %v421 = vunpack.c.l.b16 %v357
    %v422 = vpack.c.b16 %v391, %v390
    %v423 = vpack.c.b16 %v393, %v392
    %v424 = vpack.c.b16 %v395, %v394
    %v425 = vpack.c.b16 %v397, %v396
    %v426 = vpack.c.b16 %v399, %v398
    %v427 = vpack.c.b16 %v401, %v400
    %v428 = vpack.c.b16 %v403, %v402
    %v429 = vpack.c.b16 %v405, %v404
    %v430 = vpack.c.b16 %v407, %v406
    %v431 = vpack.c.b16 %v409, %v408
    %v432 = vpack.c.b16 %v411, %v410
    %v433 = vpack.c.b16 %v413, %v412
    %v434 = vpack.c.b16 %v415, %v414
    %v435 = vpack.c.b16 %v417, %v416
    %v436 = vpack.c.b16 %v419, %v418
    %v437 = vpack.c.b16 %v421, %v420
    %454 = vmatprep.subr.bf16.mxu0 0
    %455 = vmatpush1.bf16.msra.mxu0 %v422
    %456 = vmatprep.subr.bf16.mxu0 0
    %457 = vmatpush1.bf16.msra.mxu0 %v423
    %458 = vmatprep.subr.bf16.mxu0 0
    %459 = vmatpush1.bf16.msra.mxu0 %v424
    %460 = vmatprep.subr.bf16.mxu0 0
    %461 = vmatpush1.bf16.msra.mxu0 %v425
    %462 = vmatprep.subr.bf16.mxu0 0
    %463 = vmatpush1.bf16.msra.mxu0 %v426
    %464 = vmatprep.subr.bf16.mxu0 0
    %465 = vmatpush1.bf16.msra.mxu0 %v427
    %466 = vmatprep.subr.bf16.mxu0 0
    %467 = vmatpush1.bf16.msra.mxu0 %v428
    %468 = vmatprep.subr.bf16.mxu0 0
    %469 = vmatpush1.bf16.msra.mxu0 %v429
    %470 = vmatprep.subr.bf16.mxu0 0
    %471 = vmatpush1.bf16.msra.mxu0 %v430
    %472 = vmatprep.subr.bf16.mxu0 0
    %473 = vmatpush1.bf16.msra.mxu0 %v431
    %474 = vmatprep.subr.bf16.mxu0 0
    %475 = vmatpush1.bf16.msra.mxu0 %v432
    %476 = vmatprep.subr.bf16.mxu0 0
    %477 = vmatpush1.bf16.msra.mxu0 %v433
    %478 = vmatprep.subr.bf16.mxu0 0
    %479 = vmatpush1.bf16.msra.mxu0 %v434
    %480 = vmatprep.subr.bf16.mxu0 0
    %481 = vmatpush1.bf16.msra.mxu0 %v435
    %482 = vmatprep.subr.bf16.mxu0 0
    %483 = vmatpush1.bf16.msra.mxu0 %v436
    %484 = vmatprep.subr.bf16.mxu0 0
    %485 = vmatpush1.bf16.msra.mxu0 %v437
    %486 = vmatprep.mubr.bf16.mxu0 %v293
    %487 = vmatmul.mubr.bf16.gmra.mrb[0].mxu0 %v292
    %v488 = vpop.f32.mrb[0].mxu0
    %v489 = vadd.f32 0.0, %v488
    %v490 = vpop.f32.mrb[0].mxu0
    %v491 = vpop.f32.mrb[0].mxu0
    %v492 = vadd.f32 0.0, %v491
    %v493 = vpop.f32.mrb[0].mxu0
    %494 = vdwg.mxu0
    %v527 = vunpack.c.l.b16 %v294
    %v528 = vunpack.c.l.b16 %v295
    %v529 = vunpack.c.l.b16 %v296
    %v530 = vunpack.c.l.b16 %v297
    %v531 = vunpack.c.l.b16 %v298
    %v532 = vunpack.c.l.b16 %v299
    %v533 = vunpack.c.l.b16 %v300
    %v534 = vunpack.c.l.b16 %v301
    %v535 = vunpack.c.l.b16 %v302
    %v536 = vunpack.c.l.b16 %v303
    %v537 = vunpack.c.l.b16 %v304
    %v538 = vunpack.c.l.b16 %v305
    %v539 = vunpack.c.l.b16 %v306
    %v540 = vunpack.c.l.b16 %v307
    %v541 = vunpack.c.l.b16 %v308
    %v542 = vunpack.c.l.b16 %v309
    %v543 = vunpack.c.l.b16 %v310
    %v544 = vunpack.c.l.b16 %v311
    %v545 = vunpack.c.l.b16 %v312
    %v546 = vunpack.c.l.b16 %v313
    %v547 = vunpack.c.l.b16 %v314
    %v548 = vunpack.c.l.b16 %v315
    %v549 = vunpack.c.l.b16 %v316
    %v550 = vunpack.c.l.b16 %v317
    %v551 = vunpack.c.l.b16 %v318
    %v552 = vunpack.c.l.b16 %v319
    %v553 = vunpack.c.l.b16 %v320
    %v554 = vunpack.c.l.b16 %v321
    %v555 = vunpack.c.l.b16 %v322
    %v556 = vunpack.c.l.b16 %v323
    %v557 = vunpack.c.l.b16 %v324
    %v558 = vunpack.c.l.b16 %v325
    %v559 = vpack.c.b16 %v528, %v527
    %v560 = vpack.c.b16 %v530, %v529
    %v561 = vpack.c.b16 %v532, %v531
    %v562 = vpack.c.b16 %v534, %v533
    %v563 = vpack.c.b16 %v536, %v535
    %v564 = vpack.c.b16 %v538, %v537
    %v565 = vpack.c.b16 %v540, %v539
    %v566 = vpack.c.b16 %v542, %v541
    %v567 = vpack.c.b16 %v544, %v543
    %v568 = vpack.c.b16 %v546, %v545
    %v569 = vpack.c.b16 %v548, %v547
    %v570 = vpack.c.b16 %v550, %v549
    %v571 = vpack.c.b16 %v552, %v551
    %v572 = vpack.c.b16 %v554, %v553
    %v573 = vpack.c.b16 %v556, %v555
    %v574 = vpack.c.b16 %v558, %v557
    %591 = vmatprep.subr.bf16.mxu0 0
    %592 = vmatpush1.bf16.msra.mxu0 %v559
    %593 = vmatprep.subr.bf16.mxu0 0
    %594 = vmatpush1.bf16.msra.mxu0 %v560
    %595 = vmatprep.subr.bf16.mxu0 0
    %596 = vmatpush1.bf16.msra.mxu0 %v561
    %597 = vmatprep.subr.bf16.mxu0 0
    %598 = vmatpush1.bf16.msra.mxu0 %v562
    %599 = vmatprep.subr.bf16.mxu0 0
    %600 = vmatpush1.bf16.msra.mxu0 %v563
    %601 = vmatprep.subr.bf16.mxu0 0
    %602 = vmatpush1.bf16.msra.mxu0 %v564
    %603 = vmatprep.subr.bf16.mxu0 0
    %604 = vmatpush1.bf16.msra.mxu0 %v565
    %605 = vmatprep.subr.bf16.mxu0 0
    %606 = vmatpush1.bf16.msra.mxu0 %v566
    %607 = vmatprep.subr.bf16.mxu0 0
    %608 = vmatpush1.bf16.msra.mxu0 %v567
    %609 = vmatprep.subr.bf16.mxu0 0
    %610 = vmatpush1.bf16.msra.mxu0 %v568
    %611 = vmatprep.subr.bf16.mxu0 0
    %612 = vmatpush1.bf16.msra.mxu0 %v569
    %613 = vmatprep.subr.bf16.mxu0 0
    %614 = vmatpush1.bf16.msra.mxu0 %v570
    %615 = vmatprep.subr.bf16.mxu0 0
    %616 = vmatpush1.bf16.msra.mxu0 %v571
    %617 = vmatprep.subr.bf16.mxu0 0
    %618 = vmatpush1.bf16.msra.mxu0 %v572
    %619 = vmatprep.subr.bf16.mxu0 0
    %620 = vmatpush1.bf16.msra.mxu0 %v573
    %621 = vmatprep.subr.bf16.mxu0 0
    %622 = vmatpush1.bf16.msra.mxu0 %v574
    %623 = vmatprep.mubr.bf16.mxu0 %v215
    %624 = vmatmul.mubr.bf16.gmra.mrb[0].mxu0 %v214
    %v625 = vpop.f32.mrb[0].mxu0
    %v626 = vadd.f32 %v489, %v625
    %v627 = vpop.f32.mrb[0].mxu0
    %v628 = vpop.f32.mrb[0].mxu0
    %v629 = vadd.f32 %v492, %v628
    %v630 = vpop.f32.mrb[0].mxu0
    %631 = vdwg.mxu0
    %v632 = vld [vmem:[%s8] sm:$0x1]
    %v634 = vlaneseq
    %v635 = vshrl.u32 %v634, 7
    %v636 = vsub.s32 0, %v635
    %v637 = vrot.slane %v632, %v636
    %v639 = vadd.f32 %v626, %v637
    %v640 = vadd.f32 %v629, %v637
    %v641 = vmax.f32 %v639, 0.0
    %v642 = vmax.f32 %v640, 0.0
    %v643 = vld [vmem:[%s9] sm:$0x1]
    %v645 = vlaneseq
    %v646 = vshrl.u32 %v645, 7
    %v647 = vsub.s32 0, %v646
    %v648 = vrot.slane %v643, %v647
    %v650 = vmul.f32 %v641, %v648
    %v651 = vmul.f32 %v642, %v648
    %652 = vadd.xlane.f32.xlu0 %v650
    %v653 = vpop.xlane.xlu0 %652
    %654 = vadd.xlane.f32.xlu0 %v651
    %v655 = vpop.xlane.xlu0 %654
    %v656 = vld [vmem:[#allocation2] sm:$0x1]
    %v658 = vlaneseq
    %v659 = vshrl.u32 %v658, 7
    %v660 = vsub.s32 0, %v659
    %v661 = vrot.slane %v656, %v660
    %v663 = vadd.f32 %v653, %v661
    %v664 = vadd.f32 %v655, %v661
    %v665 = vxor.u32 %v663, 2147483648
    %v666 = vxor.u32 %v664, 2147483648
    %v667 = vmul.f32 %v665, 1.442695
    %v668 = vpow.pop %v667
    %v669 = vmul.f32 %v666, 1.442695
    %v670 = vpow.pop %v669
    %v671 = vadd.f32 %v668, 1.0
    %v672 = vadd.f32 %v670, 1.0
    %v673 = vrcp.pop %v671
    %v674 = vmul.f32 1.0, %v673
    %v675 = vrcp.pop %v672
    %v676 = vmul.f32 1.0, %v675
    %v677 = vsub.f32 1.0, %v674
    %v678 = vsub.f32 1.0, %v676
    %v679 = vunpack.c.l.bf16 %v214
    %v680 = vunpack.c.l.bf16 %v215
    %v681 = vunpack.c.h.bf16 %v214
    %v682 = vunpack.c.h.bf16 %v215
    %684 = vset.pattern.permute.xlu0 0
    %685 = vperm.xlu0 %684, %v674
    %v686 = vpop.permute.xlu0 %685
    %689 = vset.pattern.permute.xlu0 0
    %690 = vperm.xlu0 %689, %v676
    %v691 = vpop.permute.xlu0 %690
    %v693 = vmul.f32 %v686, %v679
    %v694 = vmul.f32 %v686, %v680
    %v695 = vmul.f32 %v691, %v681
    %v696 = vmul.f32 %v691, %v682
    %v697 = vunpack.c.l.bf16 %v292
    %v698 = vunpack.c.l.bf16 %v293
    %v699 = vunpack.c.h.bf16 %v292
    %v700 = vunpack.c.h.bf16 %v293
    %702 = vset.pattern.permute.xlu0 0
    %703 = vperm.xlu0 %702, %v677
    %v704 = vpop.permute.xlu0 %703
    %707 = vset.pattern.permute.xlu0 0
    %708 = vperm.xlu0 %707, %v678
    %v709 = vpop.permute.xlu0 %708
    %v711 = vmul.f32 %v704, %v697
    %v712 = vmul.f32 %v704, %v698
    %v713 = vmul.f32 %v709, %v699
    %v714 = vmul.f32 %v709, %v700
    %v715 = vadd.f32 %v693, %v711
    %v716 = vadd.f32 %v694, %v712
    %v717 = vadd.f32 %v695, %v713
    %v718 = vadd.f32 %v696, %v714
    %v719 = vpack.c.bf16 %v717, %v715
    %v720 = vpack.c.bf16 %v718, %v716
    %v723 = vunpack.c.l.b16 %v719
    %v724 = vunpack.c.l.b16 %v720
    %v725 = vunpack.c.h.b16 %v719
    %v726 = vunpack.c.h.b16 %v720
    %v727 = vpack.c.b16 %v724, %v723
    %v728 = vpack.c.b16 %v726, %v725
    %731 = vst [vmem:[#allocation14] sm:$0xff] %v727
    %732 = vst [vmem:[#allocation14 + $0x8] sm:$0xff] %v728
    // Predicated region
    $region70: #{tpu_custom_call.1} parent=1 // pred_check
      _
    $region71: #{tpu_custom_call.1} parent=1 // pred_check_branch
      %734 = sbr.rel (0) target = $region73
    $region72: #{tpu_custom_call.1} parent=1 // pred_region
      %s736 = ssub.s32 256, 128
      %737 = vsyncadd [#allocation5], %s736
      %s738 = sshll.u32 [#allocation14], 4
      %s739 = int_to_ptr.vmem [resolvable:$true] %s738
      %744 = dma.vmem_to_hbm [thread:$0]  %s739, 128, %s11, [#allocation5], 128, 128, 8
    $region73: #{tpu_custom_call.1} parent=1 // pred_fallthru
      _
    // Predicated region
    $region74: #{tpu_custom_call.1} parent=1 // pred_check
      _
    $region75: #{tpu_custom_call.1} parent=1 // pred_check_branch
      %746 = sbr.rel (0) target = $region77
    $region76: #{tpu_custom_call.1} parent=1 // pred_region
      %747 = dma.done [#allocation5], 256
    $region77: #{tpu_custom_call.1} parent=1 // pred_fallthru
      _
    %748 = vsyncpa [#allocation4], 1
    %749 = vsyncpa [#allocation7], 1
    %750 = vsyncpa [#allocation10], 1
    %751 = vsyncpa [#allocation13], 1
    %752 = vsyncpa [#allocation5], 1

</llo_original>
